<compile_context>
chip_gen: v7x
topology: tpu7x:2x2x1
jax: 0.10.0
libtpu: 0.0.40
codegen_flags: <defaults>
</compile_context>

<pallas_src>
import functools

import jax
import jax.numpy as jnp
from jax.experimental import pallas as pl
from jax.experimental.pallas import tpu as pltpu

LANE = 128      # vreg lane width
SUBLANE = 8     # vreg sublane count (f32)


def _round_up(x, m):
    return (x + m - 1) // m * m


def _mlp_kernel(x_ref, w1_ref, b1_ref, w2_ref, b2_ref, o_ref):
    """x_ref: (TILE_B, 1); w1/b1/w2 rows: (1, H_pad); b2: (1,) SMEM scalar;
       o_ref: (TILE_B, 128) lane-dense output slab (column 0 is the result)."""
    x = x_ref[...]                                        # (TILE_B, 1) f32
    # Layer 1: K=1 matmul == outer product -> broadcast multiply on the VPU.
    h = jnp.maximum(x * w1_ref[...] + b1_ref[...], 0.0)   # (TILE_B, H_pad)
    # Layer 2: N=1 matmul -> VPU mul + XLU cross-lane reduce (no MXU pass).
    y = jnp.sum(h * w2_ref[...], axis=-1, keepdims=True) + b2_ref[0]  # (TILE_B, 1)
    # Lane-dense store: broadcast across 128 lanes -> unmasked full-vreg vst.
    o_ref[...] = jnp.broadcast_to(y, o_ref.shape).astype(o_ref.dtype)


def prepare_params(w1, b1, w2, b2):
    """PyTorch-convention params -> padded, pre-transposed kernel layout.
    Call once (not per forward): removes per-call transposes and pads the
    hidden dim to a multiple of 128 lanes with zeros (exact contribution 0)."""
    n_hidden, n_features = w1.shape
    n_output = w2.shape[0]
    assert n_features == 1 and n_output == 1, (
        "kernel is specialized for the module's usage shapes (n_features=1, n_output=1)")
    h_pad = _round_up(n_hidden, LANE)
    w1_row = jnp.zeros((1, h_pad), jnp.float32).at[0, :n_hidden].set(
        w1[:, 0].astype(jnp.float32))
    b1_row = jnp.zeros((1, h_pad), jnp.float32).at[0, :n_hidden].set(
        b1.astype(jnp.float32))
    w2_row = jnp.zeros((1, h_pad), jnp.float32).at[0, :n_hidden].set(
        w2[0, :].astype(jnp.float32))
    b2_s = b2.reshape(1).astype(jnp.float32)
    return w1_row, b1_row, w2_row, b2_s


@functools.partial(jax.jit, static_argnames=("n_output", "tile_b"))
def _forward_prepared(x, w1_row, b1_row, w2_row, b2_s, *, n_output, tile_b):
    B = x.shape[0]
    h_pad = w1_row.shape[1]

    # Batch tile: multiple of 8 sublanes; cap at `tile_b` rows so large batches
    # pipeline over a grid instead of one giant VMEM-resident slab.
    tb = tile_b if B > tile_b else _round_up(B, SUBLANE)
    b_pad = _round_up(B, tb)
    x_p = x.astype(jnp.float32)
    if b_pad != B:
        x_p = jnp.pad(x_p, ((0, b_pad - B), (0, 0)))

    out = pl.pallas_call(
        _mlp_kernel,
        out_shape=jax.ShapeDtypeStruct((b_pad, LANE), jnp.float32),
        grid=(b_pad // tb,),
        in_specs=[
            pl.BlockSpec((tb, 1), lambda i: (i, 0)),       # x: batch-tiled
            pl.BlockSpec((1, h_pad), lambda i: (0, 0)),    # w1 row: resident
            pl.BlockSpec((1, h_pad), lambda i: (0, 0)),    # b1 row: resident
            pl.BlockSpec((1, h_pad), lambda i: (0, 0)),    # w2 row: resident
            pl.BlockSpec(memory_space=pltpu.MemorySpace.SMEM),  # b2 scalar
        ],
        out_specs=pl.BlockSpec((tb, LANE), lambda i: (i, 0)),
        compiler_params=pltpu.CompilerParams(
            dimension_semantics=("parallel",),             # v7x: split batch over 2 TCs
            vmem_limit_bytes=32 * 1024 * 1024,             # sized for 64 MiB-VMEM v7x
        ),
    )(x_p, w1_row, b1_row, w2_row, b2_s)

    # Lane-dense slab -> true (B, n_output) result.
    return out[:B, :n_output]


def net_forward(x, w1, b1, w2, b2, *, tile_b=512):
    """x: (B, 1); w1: (n_hidden, 1); b1: (n_hidden,); w2: (1, n_hidden); b2: (1,)."""
    n_output = w2.shape[0]
    w1_row, b1_row, w2_row, b2_s = prepare_params(w1, b1, w2, b2)
    return _forward_prepared(x, w1_row, b1_row, w2_row, b2_s,
                             n_output=n_output, tile_b=tile_b)


if __name__ == "__main__":
    # Shapes implied by the module's usage:
    #   x = unsqueeze(linspace(-1, 1, 100), 1) -> (100, 1)
    #   Net(n_features=1, n_hidden=32, n_output=1)
    B, n_features, n_hidden, n_output = 100, 1, 32, 1

    key = jax.random.PRNGKey(0)
    k_w1, k_b1, k_w2, k_b2 = jax.random.split(key, 4)

    x = jnp.linspace(-1.0, 1.0, B, dtype=jnp.float32).reshape(B, 1)

    # deterministic synthetic parameters (PyTorch nn.Linear shape convention)
    w1 = jax.random.normal(k_w1, (n_hidden, n_features), dtype=jnp.float32) * 0.5
    b1 = jax.random.normal(k_b1, (n_hidden,), dtype=jnp.float32) * 0.1
    w2 = jax.random.normal(k_w2, (n_output, n_hidden), dtype=jnp.float32) * 0.5
    b2 = jax.random.normal(k_b2, (n_output,), dtype=jnp.float32) * 0.1

    out = net_forward(x, w1, b1, w2, b2)
    out = jax.block_until_ready(out)

    # correctness check against pure-JAX reference of the PyTorch forward
    ref = jnp.maximum(x @ w1.T + b1, 0.0) @ w2.T + b2
    assert out.shape == (B, n_output)
    assert jnp.allclose(out, ref, atol=1e-5, rtol=1e-5)

    print("KERNEL_OK")
</pallas_src>

<mosaic_0001>
module attributes {stable_mosaic.version = 11 : i64} {
  func.func @_mlp_kernel(%arg0: i32, %arg1: memref<104x1xf32, #tpu.memory_space<vmem>>, %arg2: memref<1x128xf32, #tpu.memory_space<vmem>>, %arg3: memref<1x128xf32, #tpu.memory_space<vmem>>, %arg4: memref<1x128xf32, #tpu.memory_space<vmem>>, %arg5: memref<1xf32, #tpu.memory_space<smem>>, %arg6: memref<104x128xf32, #tpu.memory_space<vmem>>) attributes {dimension_semantics = [#tpu.dimension_semantics<parallel>], iteration_bounds = array<i64: 1>, scalar_prefetch = 0 : i64, scratch_operands = 0 : i64, tpu.core_type = #tpu.core_type<tc>, window_params = [{transform_indices = @transform_0, window_bounds = array<i64: 104, 1>}, {pipeline_mode = #tpu.pipeline_mode<synchronous>, transform_indices = @transform_1, window_bounds = array<i64: 1, 128>}, {pipeline_mode = #tpu.pipeline_mode<synchronous>, transform_indices = @transform_2, window_bounds = array<i64: 1, 128>}, {pipeline_mode = #tpu.pipeline_mode<synchronous>, transform_indices = @transform_3, window_bounds = array<i64: 1, 128>}, {transform_indices = @transform_4, window_bounds = array<i64: 1>}, {transform_indices = @transform_5, window_bounds = array<i64: 104, 128>}]} {
    %c0 = arith.constant 0 : index
    %c0_0 = arith.constant 0 : index
    %0 = vector.load %arg1[%c0, %c0_0] : memref<104x1xf32, #tpu.memory_space<vmem>>, vector<104x1xf32>
    %c0_1 = arith.constant 0 : index
    %c0_2 = arith.constant 0 : index
    %1 = vector.load %arg2[%c0_1, %c0_2] : memref<1x128xf32, #tpu.memory_space<vmem>>, vector<1x128xf32>
    %2 = vector.broadcast %0 : vector<104x1xf32> to vector<104x128xf32>
    %3 = vector.broadcast %1 : vector<1x128xf32> to vector<104x128xf32>
    %4 = arith.mulf %2, %3 : vector<104x128xf32>
    %c0_3 = arith.constant 0 : index
    %c0_4 = arith.constant 0 : index
    %5 = vector.load %arg3[%c0_3, %c0_4] : memref<1x128xf32, #tpu.memory_space<vmem>>, vector<1x128xf32>
    %6 = vector.broadcast %5 : vector<1x128xf32> to vector<104x128xf32>
    %7 = arith.addf %4, %6 : vector<104x128xf32>
    %cst = arith.constant 0.000000e+00 : f32
    %8 = vector.broadcast %cst : f32 to vector<104x128xf32>
    %9 = arith.maximumf %7, %8 : vector<104x128xf32>
    %c0_5 = arith.constant 0 : index
    %c0_6 = arith.constant 0 : index
    %10 = vector.load %arg4[%c0_5, %c0_6] : memref<1x128xf32, #tpu.memory_space<vmem>>, vector<1x128xf32>
    %11 = vector.broadcast %10 : vector<1x128xf32> to vector<104x128xf32>
    %12 = arith.mulf %9, %11 : vector<104x128xf32>
    %cst_7 = arith.constant dense<0.000000e+00> : vector<104xf32>
    %13 = vector.multi_reduction <add>, %12, %cst_7 [1] : vector<104x128xf32> to vector<104xf32>
    %14 = vector.shape_cast %13 : vector<104xf32> to vector<104x1xf32>
    %c0_8 = arith.constant 0 : index
    %15 = memref.load %arg5[%c0_8] : memref<1xf32, #tpu.memory_space<smem>>
    %16 = vector.broadcast %15 : f32 to vector<104x1xf32>
    %17 = arith.addf %14, %16 : vector<104x1xf32>
    %18 = vector.shape_cast %17 : vector<104x1xf32> to vector<104x1xf32>
    %19 = vector.broadcast %18 : vector<104x1xf32> to vector<104x128xf32>
    %c0_9 = arith.constant 0 : index
    %c0_10 = arith.constant 0 : index
    %20 = vector.load %arg6[%c0_9, %c0_10] : memref<104x128xf32, #tpu.memory_space<vmem>>, vector<104x128xf32>
    tpu.vector_store %arg6[%c0_9, %c0_10], %19 {strides = array<i32>} : memref<104x128xf32, #tpu.memory_space<vmem>>, vector<104x128xf32>,
    return
  }
  func.func @transform_0(%arg0: i32) -> (i32, i32) {
    %c0_i32 = arith.constant 0 : i32
    %c0_i32_0 = arith.constant 0 : i32
    return %arg0, %c0_i32 : i32, i32
  }
  func.func @transform_1(%arg0: i32) -> (i32, i32) {
    %c0_i32 = arith.constant 0 : i32
    %c0_i32_0 = arith.constant 0 : i32
    %c0_i32_1 = arith.constant 0 : i32
    return %c0_i32, %c0_i32_0 : i32, i32
  }
  func.func @transform_2(%arg0: i32) -> (i32, i32) {
    %c0_i32 = arith.constant 0 : i32
    %c0_i32_0 = arith.constant 0 : i32
    %c0_i32_1 = arith.constant 0 : i32
    return %c0_i32, %c0_i32_0 : i32, i32
  }
  func.func @transform_3(%arg0: i32) -> (i32, i32) {
    %c0_i32 = arith.constant 0 : i32
    %c0_i32_0 = arith.constant 0 : i32
    %c0_i32_1 = arith.constant 0 : i32
    return %c0_i32, %c0_i32_0 : i32, i32
  }
  func.func @transform_4(%arg0: i32) -> i32 {
    %c0_i32 = arith.constant 0 : i32
    %c0_i32_0 = arith.constant 0 : i32
    return %c0_i32 : i32
  }
  func.func @transform_5(%arg0: i32) -> (i32, i32) {
    %c0_i32 = arith.constant 0 : i32
    %c0_i32_0 = arith.constant 0 : i32
    return %arg0, %c0_i32 : i32, i32
  }
}

</mosaic_0001>

<llo_original>
// kernel: _forward_prepared.1
$region0: #{_forward_prepared.1}
  #allocation0 [shape = 'u32[]', space=smem, size = 0x4, offset = 0x4, fixed_abs, tag = 'smem constant byte address 0x4 - core index']
  #allocation1 [shape = 'u32[144,128]{1,0:T(1,128)}', space=vmem, size = 0x12000, scoped, tag = 'internal scratch']
  #allocation2 [shape = 'f32[1]{0:T(128)S(6)}', space=smem, size = 0x200, scoped, tag = 'scoped memory for _forward_prepared.1']
  %s0 = inlined_call_operand.vmem [shape: f32[104,1], index: 0, kind: input, shape index: {}]
  %s1 = inlined_call_operand.vmem [shape: f32[1,128], index: 1, kind: input, shape index: {}]
  %s2 = inlined_call_operand.vmem [shape: f32[1,128], index: 2, kind: input, shape index: {}]
  %s3 = inlined_call_operand.vmem [shape: f32[1,128], index: 3, kind: input, shape index: {}]
  %s4 = inlined_call_operand.<no memory space> [shape: f32[1], index: 4, kind: input, shape index: {}]
  %s5 = inlined_call_operand.vmem [shape: f32[104,128], index: 5, kind: output, shape index: {}]
  %s6 = sld [smem:[#allocation0]]
  $region30: #{_forward_prepared.1} parent=0
    _
  %s8 = ssub.s32 1, %s6
  %s9 = scalar_select 0, %s8, %s6
  %10 = sst [smem:[#allocation2]] %s4
  // Predicated region
  $region2: #{_forward_prepared.1} parent=0 // pred_check
    _
  $region3: #{_forward_prepared.1} parent=0 // pred_check_branch
    %12 = sbr.rel (0) target = $region5
  $region4: #{_forward_prepared.1} parent=0 // pred_region
    _
  $region5: #{_forward_prepared.1} parent=0 // pred_fallthru
    _
  // Predicated region
  $region6: #{_forward_prepared.1} parent=0 // pred_check
    _
  $region7: #{_forward_prepared.1} parent=0 // pred_check_branch
    %14 = sbr.rel (0) target = $region9
  $region8: #{_forward_prepared.1} parent=0 // pred_region
    _
  $region9: #{_forward_prepared.1} parent=0 // pred_fallthru
    _
  // Predicated region
  $region10: #{_forward_prepared.1} parent=0 // pred_check
    _
  $region11: #{_forward_prepared.1} parent=0 // pred_check_branch
    %16 = sbr.rel (0) target = $region13
  $region12: #{_forward_prepared.1} parent=0 // pred_region
    _
  $region13: #{_forward_prepared.1} parent=0 // pred_fallthru
    _
  // Predicated region
  $region14: #{_forward_prepared.1} parent=0 // pred_check
    _
  $region15: #{_forward_prepared.1} parent=0 // pred_check_branch
    %18 = sbr.rel (0) target = $region17
  $region16: #{_forward_prepared.1} parent=0 // pred_region
    _
  $region17: #{_forward_prepared.1} parent=0 // pred_fallthru
    _
  // Predicated region
  $region18: #{_forward_prepared.1} parent=0 // pred_check
    _
  $region19: #{_forward_prepared.1} parent=0 // pred_check_branch
    %20 = sbr.rel (0) target = $region21
  $region20: #{_forward_prepared.1} parent=0 // pred_region
    _
  $region21: #{_forward_prepared.1} parent=0 // pred_fallthru
    _
  %v21 = vld [vmem:[%s0] sm:$0xff]
  %v22 = vld [vmem:[%s0 + $0x8] sm:$0xff]
  %v23 = vld [vmem:[%s0 + $0x10] sm:$0xff]
  %v24 = vld [vmem:[%s0 + $0x18] sm:$0xff]
  %v25 = vld [vmem:[%s0 + $0x20] sm:$0xff]
  %v26 = vld [vmem:[%s0 + $0x28] sm:$0xff]
  %v27 = vld [vmem:[%s0 + $0x30] sm:$0xff]
  %v28 = vld [vmem:[%s0 + $0x38] sm:$0xff]
  %v29 = vld [vmem:[%s0 + $0x40] sm:$0xff]
  %v30 = vld [vmem:[%s0 + $0x48] sm:$0xff]
  %v31 = vld [vmem:[%s0 + $0x50] sm:$0xff]
  %v32 = vld [vmem:[%s0 + $0x58] sm:$0xff]
  %v33 = vld [vmem:[%s0 + $0x60] sm:$0xff]
  %v34 = vld [vmem:[%s1] sm:$0x1]
  %36 = vset.pattern.permute.xlu0 0
  %37 = vperm.xlu0 %36, %v21
  %v38 = vpop.permute.xlu0 %37
  %41 = vset.pattern.permute.xlu0 0
  %42 = vperm.xlu0 %41, %v22
  %v43 = vpop.permute.xlu0 %42
  %46 = vset.pattern.permute.xlu0 0
  %47 = vperm.xlu0 %46, %v23
  %v48 = vpop.permute.xlu0 %47
  %51 = vset.pattern.permute.xlu0 0
  %52 = vperm.xlu0 %51, %v24
  %v53 = vpop.permute.xlu0 %52
  %56 = vset.pattern.permute.xlu0 0
  %57 = vperm.xlu0 %56, %v25
  %v58 = vpop.permute.xlu0 %57
  %61 = vset.pattern.permute.xlu0 0
  %62 = vperm.xlu0 %61, %v26
  %v63 = vpop.permute.xlu0 %62
  %66 = vset.pattern.permute.xlu0 0
  %67 = vperm.xlu0 %66, %v27
  %v68 = vpop.permute.xlu0 %67
  %71 = vset.pattern.permute.xlu0 0
  %72 = vperm.xlu0 %71, %v28
  %v73 = vpop.permute.xlu0 %72
  %76 = vset.pattern.permute.xlu0 0
  %77 = vperm.xlu0 %76, %v29
  %v78 = vpop.permute.xlu0 %77
  %81 = vset.pattern.permute.xlu0 0
  %82 = vperm.xlu0 %81, %v30
  %v83 = vpop.permute.xlu0 %82
  %86 = vset.pattern.permute.xlu0 0
  %87 = vperm.xlu0 %86, %v31
  %v88 = vpop.permute.xlu0 %87
  %91 = vset.pattern.permute.xlu0 0
  %92 = vperm.xlu0 %91, %v32
  %v93 = vpop.permute.xlu0 %92
  %96 = vset.pattern.permute.xlu0 0
  %97 = vperm.xlu0 %96, %v33
  %v98 = vpop.permute.xlu0 %97
  %v101 = vlaneseq
  %v102 = vshrl.u32 %v101, 7
  %v103 = vsub.s32 0, %v102
  %v104 = vrot.slane %v34, %v103
  %v106 = vmul.f32 %v38, %v104
  %v107 = vmul.f32 %v43, %v104
  %v108 = vmul.f32 %v48, %v104
  %v109 = vmul.f32 %v53, %v104
  %v110 = vmul.f32 %v58, %v104
  %v111 = vmul.f32 %v63, %v104
  %v112 = vmul.f32 %v68, %v104
  %v113 = vmul.f32 %v73, %v104
  %v114 = vmul.f32 %v78, %v104
  %v115 = vmul.f32 %v83, %v104
  %v116 = vmul.f32 %v88, %v104
  %v117 = vmul.f32 %v93, %v104
  %v118 = vmul.f32 %v98, %v104
  %v119 = vld [vmem:[%s2] sm:$0x1]
  %v121 = vlaneseq
  %v122 = vshrl.u32 %v121, 7
  %v123 = vsub.s32 0, %v122
  %v124 = vrot.slane %v119, %v123
  %v126 = vadd.f32 %v106, %v124
  %v127 = vadd.f32 %v107, %v124
  %v128 = vadd.f32 %v108, %v124
  %v129 = vadd.f32 %v109, %v124
  %v130 = vadd.f32 %v110, %v124
  %v131 = vadd.f32 %v111, %v124
  %v132 = vadd.f32 %v112, %v124
  %v133 = vadd.f32 %v113, %v124
  %v134 = vadd.f32 %v114, %v124
  %v135 = vadd.f32 %v115, %v124
  %v136 = vadd.f32 %v116, %v124
  %v137 = vadd.f32 %v117, %v124
  %v138 = vadd.f32 %v118, %v124
  %v139 = vmax.f32 %v126, 0.0
  %v140 = vmax.f32 %v127, 0.0
  %v141 = vmax.f32 %v128, 0.0
  %v142 = vmax.f32 %v129, 0.0
  %v143 = vmax.f32 %v130, 0.0
  %v144 = vmax.f32 %v131, 0.0
  %v145 = vmax.f32 %v132, 0.0
  %v146 = vmax.f32 %v133, 0.0
  %v147 = vmax.f32 %v134, 0.0
  %v148 = vmax.f32 %v135, 0.0
  %v149 = vmax.f32 %v136, 0.0
  %v150 = vmax.f32 %v137, 0.0
  %v151 = vmax.f32 %v138, 0.0
  %v152 = vld [vmem:[%s3] sm:$0x1]
  %v154 = vlaneseq
  %v155 = vshrl.u32 %v154, 7
  %v156 = vsub.s32 0, %v155
  %v157 = vrot.slane %v152, %v156
  %v159 = vmul.f32 %v139, %v157
  %v160 = vmul.f32 %v140, %v157
  %v161 = vmul.f32 %v141, %v157
  %v162 = vmul.f32 %v142, %v157
  %v163 = vmul.f32 %v143, %v157
  %v164 = vmul.f32 %v144, %v157
  %v165 = vmul.f32 %v145, %v157
  %v166 = vmul.f32 %v146, %v157
  %v167 = vmul.f32 %v147, %v157
  %v168 = vmul.f32 %v148, %v157
  %v169 = vmul.f32 %v149, %v157
  %v170 = vmul.f32 %v150, %v157
  %v171 = vmul.f32 %v151, %v157
  %172 = vadd.xlane.f32.xlu0 %v159
  %v173 = vpop.xlane.xlu0 %172
  %174 = vadd.xlane.f32.xlu0 %v160
  %v175 = vpop.xlane.xlu0 %174
  %176 = vadd.xlane.f32.xlu0 %v161
  %v177 = vpop.xlane.xlu0 %176
  %178 = vadd.xlane.f32.xlu0 %v162
  %v179 = vpop.xlane.xlu0 %178
  %180 = vadd.xlane.f32.xlu0 %v163
  %v181 = vpop.xlane.xlu0 %180
  %182 = vadd.xlane.f32.xlu0 %v164
  %v183 = vpop.xlane.xlu0 %182
  %184 = vadd.xlane.f32.xlu0 %v165
  %v185 = vpop.xlane.xlu0 %184
  %186 = vadd.xlane.f32.xlu0 %v166
  %v187 = vpop.xlane.xlu0 %186
  %188 = vadd.xlane.f32.xlu0 %v167
  %v189 = vpop.xlane.xlu0 %188
  %190 = vadd.xlane.f32.xlu0 %v168
  %v191 = vpop.xlane.xlu0 %190
  %192 = vadd.xlane.f32.xlu0 %v169
  %v193 = vpop.xlane.xlu0 %192
  %194 = vadd.xlane.f32.xlu0 %v170
  %v195 = vpop.xlane.xlu0 %194
  %196 = vadd.xlane.f32.xlu0 %v171
  %v197 = vpop.xlane.xlu0 %196
  %s198 = sld [smem:[#allocation2]]
  %v199 = vstv %s198
  %v200 = vadd.f32 %v173, %v199
  %v201 = vadd.f32 %v175, %v199
  %v202 = vadd.f32 %v177, %v199
  %v203 = vadd.f32 %v179, %v199
  %v204 = vadd.f32 %v181, %v199
  %v205 = vadd.f32 %v183, %v199
  %v206 = vadd.f32 %v185, %v199
  %v207 = vadd.f32 %v187, %v199
  %v208 = vadd.f32 %v189, %v199
  %v209 = vadd.f32 %v191, %v199
  %v210 = vadd.f32 %v193, %v199
  %v211 = vadd.f32 %v195, %v199
  %v212 = vadd.f32 %v197, %v199
  %213 = vst [vmem:[%s5] sm:$0xff] %v200
  %214 = vst [vmem:[%s5 + $0x8] sm:$0xff] %v201
  %215 = vst [vmem:[%s5 + $0x10] sm:$0xff] %v202
  %216 = vst [vmem:[%s5 + $0x18] sm:$0xff] %v203
  %217 = vst [vmem:[%s5 + $0x20] sm:$0xff] %v204
  %218 = vst [vmem:[%s5 + $0x28] sm:$0xff] %v205
  %219 = vst [vmem:[%s5 + $0x30] sm:$0xff] %v206
  %220 = vst [vmem:[%s5 + $0x38] sm:$0xff] %v207
  %221 = vst [vmem:[%s5 + $0x40] sm:$0xff] %v208
  %222 = vst [vmem:[%s5 + $0x48] sm:$0xff] %v209
  %223 = vst [vmem:[%s5 + $0x50] sm:$0xff] %v210
  %224 = vst [vmem:[%s5 + $0x58] sm:$0xff] %v211
  %225 = vst [vmem:[%s5 + $0x60] sm:$0xff] %v212
  // Predicated region
  $region22: #{_forward_prepared.1} parent=0 // pred_check
    _
  $region23: #{_forward_prepared.1} parent=0 // pred_check_branch
    %227 = sbr.rel (0) target = $region25
  $region24: #{_forward_prepared.1} parent=0 // pred_region
    _
  $region25: #{_forward_prepared.1} parent=0 // pred_fallthru
    _
  // Predicated region
  $region26: #{_forward_prepared.1} parent=0 // pred_check
    _
  $region27: #{_forward_prepared.1} parent=0 // pred_check_branch
    %229 = sbr.rel (0) target = $region29
  $region28: #{_forward_prepared.1} parent=0 // pred_region
    _
  $region29: #{_forward_prepared.1} parent=0 // pred_fallthru
    _

</llo_original>
